<compile_context>
chip_gen: v7x
topology: tpu7x:2x2x1
jax: 0.10.0
libtpu: 0.0.40
codegen_flags: <defaults>
</compile_context>

<pallas_src>
import functools
import math
import random

import jax
import jax.numpy as jnp
import numpy as np
from jax import lax
from jax.experimental import pallas as pl
from jax.experimental.pallas import tpu as pltpu


_DEFAULT_BUDGET_BYTES = 8 * 1024 * 1024     # per single VMEM buffer (row path)
_WIDE_BUDGET_BYTES = 6 * 1024 * 1024        # wide path keeps 3 arrays live
_VMEM_LIMIT_BYTES = 48 * 1024 * 1024        # < v7x's 64 MiB physical VMEM
_MIN_GRID_STEPS = 4                         # keep both v7x TensorCores fed


# --------------------------------------------------------------------------
# Kernels
# --------------------------------------------------------------------------
def _roll_rows_kernel(x_ref, o_ref, *, seg, shift):
    """Rotate every `seg`-wide segment of each row left by `shift` lanes.

    x_ref/o_ref: (rows, L) with L a multiple of seg, 1 <= shift < seg.
    pltpu.roll follows np.roll semantics: roll(x, s)[p] = x[(p - s) % L].
    """
    x = x_ref[...]
    L = x.shape[-1]
    if seg == L:
        # Single segment per row: one lane rotation. out[p] = x[(p+shift) % L].
        o_ref[...] = pltpu.roll(x, shift=L - shift, axis=1)
    else:
        # g = L // seg packed segments per row.  With lane p = s*seg + j we
        # need out[p] = x[s*seg + (j + shift) % seg]:
        #   j <  seg - shift  ->  x[p + shift]        (= roll by L - shift)
        #   j >= seg - shift  ->  x[p + shift - seg]  (= roll by seg - shift)
        a = pltpu.roll(x, shift=L - shift, axis=1)
        b = pltpu.roll(x, shift=seg - shift, axis=1)
        lane = lax.broadcasted_iota(jnp.int32, x.shape, x.ndim - 1)
        o_ref[...] = jnp.where(lane % seg < seg - shift, a, b)


def _wide_shift_kernel(a_ref, b_ref, o_ref, *, off, tw):
    """out[:, c] = a[:, c + off] for c < tw - off, else b[:, c + off - tw]."""
    a = pltpu.roll(a_ref[...], shift=tw - off, axis=1)
    b = pltpu.roll(b_ref[...], shift=tw - off, axis=1)
    lane = lax.broadcasted_iota(jnp.int32, a.shape, a.ndim - 1)
    o_ref[...] = jnp.where(lane < tw - off, a, b)


def _wide_copy_kernel(a_ref, o_ref):
    # Wide path when the shift is an exact multiple of the W tile: pure
    # block-shifted copy (the index_map does the rotation).
    o_ref[...] = a_ref[...]


# --------------------------------------------------------------------------
# Tile selection helpers
# --------------------------------------------------------------------------
def _sublane_align(itemsize):
    # f32 -> 8, bf16 -> 16, int8/fp8 -> 32 (sub-32-bit dtypes pack along sublanes).
    return max(8, 32 // max(1, itemsize))


def _choose_row_tile(n_rows, width, itemsize, budget_bytes):
    sub = _sublane_align(itemsize)
    rows_budget = max(1, budget_bytes // max(1, width * itemsize))
    rows_split = pl.cdiv(n_rows, _MIN_GRID_STEPS)   # >= 4 grid steps if possible
    rows = min(rows_budget, rows_split, n_rows)
    if rows >= n_rows:
        return n_rows
    rows = (rows // sub) * sub                      # sublane-aligned tile
    if rows == 0:
        rows = min(sub, n_rows)
    return rows


def _choose_w_tile(W, itemsize, budget_bytes, sub):
    # Largest tw that divides W, is a multiple of 128 and keeps a (sub, tw)
    # tile within the per-buffer budget.  (W % 128 == 0 is checked upstream.)
    m = W // 128
    dmax = max(1, budget_bytes // (sub * 128 * itemsize))
    best = 1
    d = 1
    while d * d <= m:
        if m % d == 0:
            for cand in (d, m // d):
                if cand <= dmax and cand > best:
                    best = cand
        d += 1
    return 128 * best


def _compiler_params(semantics):
    return pltpu.CompilerParams(
        dimension_semantics=semantics,
        vmem_limit_bytes=_VMEM_LIMIT_BYTES,
    )


# --------------------------------------------------------------------------
# Wrappers
# --------------------------------------------------------------------------
def _phase_shuffle_wide(x, shift, tw, budget):
    """Fallback for very wide W: tile both rows and W across the grid."""
    B, C, H, W = x.shape
    itemsize = jnp.dtype(x.dtype).itemsize
    R = B * C * H
    x2 = x.reshape(R, W)                       # free, contiguous reshape

    nW = W // tw
    k0 = shift // tw                           # first input block a tile needs
    off = shift % tw                           # in-block lane offset
    row_tile = _choose_row_tile(R, tw, itemsize, budget)
    grid = (pl.cdiv(R, row_tile), nW)
    out_spec = pl.BlockSpec((row_tile, tw), lambda i, j: (i, j))

    if off == 0:
        out2 = pl.pallas_call(
            _wide_copy_kernel,
            out_shape=jax.ShapeDtypeStruct((R, W), x.dtype),
            grid=grid,
            in_specs=[pl.BlockSpec((row_tile, tw),
                                   lambda i, j: (i, (j + k0) % nW))],
            out_specs=out_spec,
            compiler_params=_compiler_params(("parallel", "parallel")),
        )(x2)
    else:
        out2 = pl.pallas_call(
            functools.partial(_wide_shift_kernel, off=off, tw=tw),
            out_shape=jax.ShapeDtypeStruct((R, W), x.dtype),
            grid=grid,
            in_specs=[
                pl.BlockSpec((row_tile, tw), lambda i, j: (i, (j + k0) % nW)),
                pl.BlockSpec((row_tile, tw), lambda i, j: (i, (j + k0 + 1) % nW)),
            ],
            out_specs=out_spec,
            compiler_params=_compiler_params(("parallel", "parallel")),
        )(x2, x2)

    return out2.reshape(B, C, H, W)


def phase_shuffle_2d(x, move, *, budget_bytes=None):
    """Pallas forward of PhaseShuffle2d for a static integer `move`."""
    B, C, H, W = x.shape
    shift = move % W                           # left rotation amount in [0, W-1]
    if shift == 0:
        return x

    itemsize = jnp.dtype(x.dtype).itemsize
    budget = _DEFAULT_BUDGET_BYTES if budget_bytes is None else int(budget_bytes)
    sub = _sublane_align(itemsize)
    R = B * C * H

    # ---- Wide-W fallback: even a minimal full-row tile blows the budget. ----
    if sub * W * itemsize > budget and W >= 128 and W % 128 == 0:
        wide_budget = min(budget, _WIDE_BUDGET_BYTES)
        tw = _choose_w_tile(W, itemsize, wide_budget, sub)
        if tw < W:
            return _phase_shuffle_wide(x, shift, tw, wide_budget)
    # TODO(synk): extremely wide W that is NOT a multiple of 128 falls through
    # to the full-row path below (correct, but may need a larger vmem limit).

    # ---- Row path (lane-dense packed when W is a narrow divisor of 128). ----
    if W < 128 and 128 % W == 0:
        g = math.gcd(R, 128 // W)              # pack g segments per 128-lane row
    else:
        g = 1
    L = g * W
    Rp = R // g

    x2 = x.reshape(Rp, L)                      # free, contiguous reshape
    row_tile = _choose_row_tile(Rp, L, itemsize, budget)
    grid = (pl.cdiv(Rp, row_tile),)

    out2 = pl.pallas_call(
        functools.partial(_roll_rows_kernel, seg=W, shift=shift),
        out_shape=jax.ShapeDtypeStruct((Rp, L), x.dtype),
        grid=grid,
        in_specs=[pl.BlockSpec((row_tile, L), lambda i: (i, 0))],
        out_specs=pl.BlockSpec((row_tile, L), lambda i: (i, 0)),
        compiler_params=_compiler_params(("parallel",)),
    )(x2)

    return out2.reshape(B, C, H, W)


class PhaseShuffle2d:
    """Drop-in (forward-only) equivalent of the PyTorch module."""

    def __init__(self, n=2):
        self.n = n
        self.random = random.Random(1)

    def __call__(self, x, move=None):
        return self.forward(x, move)

    def forward(self, x, move=None):
        if move is None:
            move = self.random.randint(-self.n, self.n)
        if move == 0:
            return x
        return phase_shuffle_2d(x, move)


def _reference(x, move):
    # Literal transcription of the PyTorch forward (in JAX).
    if move == 0:
        return x
    left = x[:, :, :, :move]
    right = x[:, :, :, move:]
    return jnp.concatenate([right, left], axis=3)


if __name__ == "__main__":
    key = jax.random.PRNGKey(0)
    B, C, H, W = 2, 4, 16, 16
    x = jax.random.normal(key, (B, C, H, W), dtype=jnp.float32)

    # 1) Module path: move drawn from random.Random(1), exactly as in PyTorch.
    mod = PhaseShuffle2d(n=2)
    drawn_move = random.Random(1).randint(-2, 2)   # same first draw
    out_mod = jax.block_until_ready(mod(x))
    np.testing.assert_allclose(np.asarray(out_mod),
                               np.asarray(_reference(x, drawn_move)),
                               rtol=0, atol=0)

    # 2) Explicit moves over [-n, n] on the lane-dense packed path (W=16).
    for move in (-2, -1, 0, 1, 2):
        out = jax.block_until_ready(phase_shuffle_2d(x, move))
        ref = _reference(x, move)
        assert out.shape == ref.shape, (out.shape, ref.shape)
        np.testing.assert_allclose(np.asarray(out), np.asarray(ref),
                                   rtol=0, atol=0)

    # 3) Already lane-dense W (single-roll row path).
    xb = jax.random.normal(jax.random.PRNGKey(1), (1, 2, 8, 128), jnp.float32)
    for move in (-2, 1):
        out = jax.block_until_ready(phase_shuffle_2d(xb, move))
        np.testing.assert_allclose(np.asarray(out),
                                   np.asarray(_reference(xb, move)),
                                   rtol=0, atol=0)

    # 4) Wide-W fallback (forced with a tiny per-buffer budget so W is tiled).
    xc = jax.random.normal(jax.random.PRNGKey(2), (1, 1, 8, 512), jnp.float32)
    for move in (-2, 1):
        out = jax.block_until_ready(
            phase_shuffle_2d(xc, move, budget_bytes=8 * 1024))
        np.testing.assert_allclose(np.asarray(out),
                                   np.asarray(_reference(xc, move)),
                                   rtol=0, atol=0)

    print("KERNEL_OK")
</pallas_src>

<mosaic_0001>
module attributes {stable_mosaic.version = 11 : i64} {
  func.func @_roll_rows_kernel(%arg0: i32, %arg1: memref<8x128xf32, #tpu.memory_space<vmem>>, %arg2: memref<8x128xf32, #tpu.memory_space<vmem>>) attributes {dimension_semantics = [#tpu.dimension_semantics<parallel>], iteration_bounds = array<i64: 2>, scalar_prefetch = 0 : i64, scratch_operands = 0 : i64, tpu.core_type = #tpu.core_type<tc>, window_params = [{transform_indices = @transform_0, window_bounds = array<i64: 8, 128>}, {transform_indices = @transform_1, window_bounds = array<i64: 8, 128>}]} {
    %c0 = arith.constant 0 : index
    %c0_0 = arith.constant 0 : index
    %0 = vector.load %arg1[%c0, %c0_0] : memref<8x128xf32, #tpu.memory_space<vmem>>, vector<8x128xf32>
    %c113_i32 = arith.constant 113 : i32
    %1 = tpu.dynamic_rotate %0 by %c113_i32 dim 1 : vector<8x128xf32>, i32 -> vector<8x128xf32>
    %c1_i32 = arith.constant 1 : i32
    %2 = tpu.dynamic_rotate %0 by %c1_i32 dim 1 : vector<8x128xf32>, i32 -> vector<8x128xf32>
    %3 = tpu.iota {dimensions = array<i32: 1>} : vector<8x128xi32>
    %c16_i32 = arith.constant 16 : i32
    %c0_i32 = arith.constant 0 : i32
    %4 = arith.cmpi eq, %c16_i32, %c0_i32 : i32
    %c1_i32_1 = arith.constant 1 : i32
    %5 = arith.select %4, %c1_i32_1, %c16_i32 : i32
    %6 = vector.broadcast %5 : i32 to vector<8x128xi32>
    %7 = arith.remsi %3, %6 : vector<8x128xi32>
    %c0_i32_2 = arith.constant 0 : i32
    %8 = vector.broadcast %c0_i32_2 : i32 to vector<8x128xi32>
    %9 = arith.cmpi ne, %7, %8 : vector<8x128xi32>
    %c0_i32_3 = arith.constant 0 : i32
    %10 = vector.broadcast %c0_i32_3 : i32 to vector<8x128xi32>
    %11 = arith.cmpi slt, %7, %10 : vector<8x128xi32>
    %c0_i32_4 = arith.constant 0 : i32
    %12 = arith.cmpi slt, %5, %c0_i32_4 : i32
    %13 = vector.broadcast %12 : i1 to vector<8x128xi1>
    %14 = vector.broadcast %13 : vector<8x128xi1> to vector<8x128xi1>
    %15 = arith.xori %11, %14 : vector<8x128xi1>
    %16 = arith.andi %15, %9 : vector<8x128xi1>
    %17 = vector.broadcast %5 : i32 to vector<8x128xi32>
    %18 = arith.addi %7, %17 : vector<8x128xi32>
    %19 = arith.select %16, %18, %7 : vector<8x128xi1>, vector<8x128xi32>
    %c1_i32_5 = arith.constant 1 : i32
    %20 = vector.broadcast %c1_i32_5 : i32 to vector<8x128xi32>
    %21 = arith.cmpi slt, %19, %20 : vector<8x128xi32>
    %22 = arith.select %21, %1, %2 : vector<8x128xi1>, vector<8x128xf32>
    %c0_6 = arith.constant 0 : index
    %c0_7 = arith.constant 0 : index
    %23 = vector.load %arg2[%c0_6, %c0_7] : memref<8x128xf32, #tpu.memory_space<vmem>>, vector<8x128xf32>
    tpu.vector_store %arg2[%c0_6, %c0_7], %22 {strides = array<i32>} : memref<8x128xf32, #tpu.memory_space<vmem>>, vector<8x128xf32>,
    return
  }
  func.func @transform_0(%arg0: i32) -> (i32, i32) {
    %c0_i32 = arith.constant 0 : i32
    %c0_i32_0 = arith.constant 0 : i32
    return %arg0, %c0_i32 : i32, i32
  }
  func.func @transform_1(%arg0: i32) -> (i32, i32) {
    %c0_i32 = arith.constant 0 : i32
    %c0_i32_0 = arith.constant 0 : i32
    return %arg0, %c0_i32 : i32, i32
  }
}

</mosaic_0001>

<llo_original>
// kernel: tpu_custom_call.1
$region0: #{tpu_custom_call.1}
  #allocation0 [shape = 'u32[]', space=smem, size = 0x4, offset = 0x4, fixed_abs, tag = 'smem constant byte address 0x4 - core index']
  #allocation1 [shape = 'u32[144,128]{1,0:T(1,128)}', space=vmem, size = 0x12000, scoped, tag = 'internal scratch']
  %s0 = inlined_call_operand.hbm [shape: f32[16,128], index: 0, kind: input, shape index: {}]
  %s1 = inlined_call_operand.hbm [shape: f32[16,128], index: 1, kind: output, shape index: {}]
  %s2 = sld [smem:[#allocation0]]
  $region41: #{tpu_custom_call.1} parent=0
    _
  %s4 = ssub.s32 1, %s2
  %s5 = scalar_select 0, %s4, %s2
  $region1: #{tpu_custom_call.1} parent=0
    #allocation2 [shape = 'u8[8192]{0}', space=vmem, size = 0x2000, scoped, tag = 'input window, operand 0']
    #allocation3 [shape = 's32[2]{0}', space=sflag, size = 0x8, scoped, tag = 'scoped memory for tpu_custom_call.1']
    #allocation4 [shape = 's32[2]{0}', space=sflag, size = 0x8, scoped, tag = 'scoped memory for tpu_custom_call.1']
    #allocation5 [shape = 'u8[8192]{0}', space=vmem, size = 0x2000, scoped, tag = 'output window, operand 0']
    %6 = vsyncpa [#allocation3], 0
    %s7 = scalar_lea.sflag [#allocation3], 1
    %8 = vsyncpa %s7, 0
    %9 = vsyncpa [#allocation4], 0
    %s10 = scalar_lea.sflag [#allocation4], 1
    %11 = vsyncpa %s10, 0
    loop: start=0, step=1, limit=4
    $region2: #{tpu_custom_call.1} parent=1 // loop_pre_header
      _
    $region3: #{tpu_custom_call.1} parent=1 // loop_header
      %s13 = sphi 0, %s17
      %p14 = scmp.ge.s32.totalorder %s13, 4
      %s23 = sphi 0, %s25
      %s26 = sphi 0, %s23
      %s27 = sphi 0, %s26
      %s43 = sphi 0, %s27
      %s49 = sphi 0, %s51
      %s52 = sphi 0, %s49
      %s53 = sphi 0, %s52
      %s69 = sphi 0, %s53
    $region4: #{tpu_custom_call.1} parent=1 // loop_header_branch
      %16 = sbr.rel (%p14) target = $region8
    $region5: #{tpu_custom_call.1} parent=1 // loop_body
      %s18 = ssub.s32 %s13, 1
      %s19 = ssub.s32 %s13, 2
      %s20 = sadd.s32 %s13, 1
      %s21 = ssub.s32 %s13, %s20
      %p22 = scmp.eq.s32.totalorder %s21, 0
      %s24 = sadd.s32 %s23, 1
      %s25 = scalar_select %p22, %s23, %s24
      %p28 = pneg %p22
      %p29 = scmp.eq.s32.totalorder %s13, 1
      %p30 = por %p28, %p29
      %p31 = scmp.ne.s32.totalorder %s23, %s26
      %p32 = scmp.eq.s32.totalorder %s13, 0
      %p33 = por %p31, %p32
      %p34 = scmp.ne.s32.totalorder %s23, %s26
      %p35 = scmp.eq.s32.totalorder %s18, 1
      %p36 = por %p34, %p35
      %p37 = scmp.ne.s32.totalorder %s26, %s27
      %p38 = scmp.eq.s32.totalorder %s18, 0
      %p39 = por %p37, %p38
      %p40 = scmp.ne.s32.totalorder %s26, %s27
      %p41 = scmp.eq.s32.totalorder %s19, 1
      %p42 = por %p40, %p41
      %p44 = scmp.ne.s32.totalorder %s27, %s43
      %p45 = scmp.eq.s32.totalorder %s19, 0
      %p46 = por %p44, %p45
      %s47 = ssub.s32 %s13, %s20
      %p48 = scmp.eq.s32.totalorder %s47, 0
      %s50 = sadd.s32 %s49, 1
      %s51 = scalar_select %p48, %s49, %s50
      %p54 = pneg %p48
      %p55 = scmp.eq.s32.totalorder %s13, 1
      %p56 = por %p54, %p55
      %p57 = scmp.ne.s32.totalorder %s49, %s52
      %p58 = scmp.eq.s32.totalorder %s13, 0
      %p59 = por %p57, %p58
      %p60 = scmp.ne.s32.totalorder %s49, %s52
      %p61 = scmp.eq.s32.totalorder %s18, 1
      %p62 = por %p60, %p61
      %p63 = scmp.ne.s32.totalorder %s52, %s53
      %p64 = scmp.eq.s32.totalorder %s18, 0
      %p65 = por %p63, %p64
      %p66 = scmp.ne.s32.totalorder %s52, %s53
      %p67 = scmp.eq.s32.totalorder %s19, 1
      %p68 = por %p66, %p67
      %p70 = scmp.ne.s32.totalorder %s53, %s69
      %p71 = scmp.eq.s32.totalorder %s19, 0
      %p72 = por %p70, %p71
      %p73 = scmp.le.s32.totalorder 1, %s13
      %p74 = scmp.lt.s32.totalorder %s13, 3
      %p75 = pnand %p73, %p74
      %p76 = pneg %p75
      // Predicated region
      $region9: #{tpu_custom_call.1} parent=5 // pred_check
        _
      $region10: #{tpu_custom_call.1} parent=5 // pred_check_branch
        %78 = sbr.rel (%p75) target = $region12
      $region11: #{tpu_custom_call.1} parent=5 // pred_region
        %s79 = ssub.s32 %s13, 1
      $region12: #{tpu_custom_call.1} parent=5 // pred_fallthru
        _
      %p80 = scmp.lt.s32.totalorder %s13, 2
      // Predicated region
      $region13: #{tpu_custom_call.1} parent=5 // pred_check
        %p81 = pneg %p80
      $region14: #{tpu_custom_call.1} parent=5 // pred_check_branch
        %83 = sbr.rel (%p81) target = $region16
      $region15: #{tpu_custom_call.1} parent=5 // pred_region
        // Predicated region
        $region17: #{tpu_custom_call.1} parent=15 // pred_check
          %p84 = pneg %p33
        $region18: #{tpu_custom_call.1} parent=15 // pred_check_branch
          %86 = sbr.rel (%p84) target = $region20
        $region19: #{tpu_custom_call.1} parent=15 // pred_region
          %s87 = sand.u32 %s23, 1
          %s88 = scalar_lea.sflag [#allocation3], %s87
          %s89 = sand.u32 %s23, 1
          %s90 = smul.addr %s89, 8
          %s91 = scalar_lea.vmem [#allocation2], %s90
          %s93 = ssub.s32 128, 128
          %94 = vsyncadd %s88, %s93
          %s95 = smul.addr %s13, 128
          %s96 = scalar_lea.hbm %s0, %s95
          %s98 = sshll.u32 %s91, 4
          %s99 = int_to_ptr.vmem [resolvable:$true] %s98
          %101 = dma.hbm_to_vmem [thread:$0]  %s96, 128, %s99, %s88
        $region20: #{tpu_custom_call.1} parent=15 // pred_fallthru
          _
      $region16: #{tpu_custom_call.1} parent=5 // pred_fallthru
        _
      %p102 = scmp.le.s32.totalorder 1, %s13
      %p103 = scmp.lt.s32.totalorder %s13, 3
      %p104 = pnand %p102, %p103
      %p105 = pneg %p104
      // Predicated region
      $region21: #{tpu_custom_call.1} parent=5 // pred_check
        _
      $region22: #{tpu_custom_call.1} parent=5 // pred_check_branch
        %107 = sbr.rel (%p104) target = $region24
      $region23: #{tpu_custom_call.1} parent=5 // pred_region
        %s108 = ssub.s32 %s13, 1
        %s109 = sand.u32 %s26, 1
        %s110 = scalar_lea.sflag [#allocation3], %s109
        %s111 = sand.u32 %s26, 1
        %s112 = smul.addr %s111, 8
        %s113 = scalar_lea.vmem [#allocation2], %s112
        // Predicated region
        $region25: #{tpu_custom_call.1} parent=23 // pred_check
          %p114 = pneg %p39
        $region26: #{tpu_custom_call.1} parent=23 // pred_check_branch
          %116 = sbr.rel (%p114) target = $region28
        $region27: #{tpu_custom_call.1} parent=23 // pred_region
          %117 = dma.done %s110, 128
        $region28: #{tpu_custom_call.1} parent=23 // pred_fallthru
          _
        %s118 = sand.u32 %s26, 1
        %s119 = scalar_lea.sflag [#allocation3], %s118
        %s120 = sand.u32 %s26, 1
        %s121 = smul.addr %s120, 8
        %s122 = scalar_lea.vmem [#allocation2], %s121
        %p123 = pneg %p39
        %p124 = pneg %p36
        %p125 = pneg %p65
        %p126 = pneg %p62
        %s127 = sand.u32 %s52, 1
        %s128 = scalar_lea.sflag [#allocation4], %s127
        %s129 = sand.u32 %s52, 1
        %s130 = smul.addr %s129, 8
        %s131 = scalar_lea.vmem [#allocation5], %s130
        %v132 = vld [vmem:[%s113] sm:$0xff]
        %133 = vrot.lane.b32.xlu0 %v132, 113
        %v134 = vpop.permute.xlu0 %133
        %135 = vrot.lane.b32.xlu0 %v132, 1
        %v136 = vpop.permute.xlu0 %135
        %v137 = vlaneseq
        %v138 = vand.u32 %v137, 127
        %vm139 = vcmp.lt.s32.totalorder %v138, 0
        %v140 = vsub.s32 0, %v138
        %v141 = vsel %vm139, %v140, %v138
        %v142 = vshrl.u32 %v141, 4
        %v143 = vand.u32 %v141, 15
        %v144 = vsub.s32 0, %v143
        %v145 = vsel %vm139, %v144, %v143
        %vm146 = vcmp.ne.s32.totalorder %v145, 0
        %vm147 = vcmp.lt.s32.totalorder %v145, 0
        %vm148 = vmand %vm147, %vm146
        %v149 = vadd.s32 %v145, 16
        %v150 = vsel %vm148, %v149, %v145
        %vm151 = vcmp.lt.s32.totalorder %v150, 1
        %v152 = vsel %vm151, %v134, %v136
        %153 = vst [vmem:[%s131] sm:$0xff] %v152
        %s154 = sand.u32 %s52, 1
        %s155 = scalar_lea.sflag [#allocation4], %s154
        %s156 = sand.u32 %s52, 1
        %s157 = smul.addr %s156, 8
        %s158 = scalar_lea.vmem [#allocation5], %s157
        // Predicated region
        $region29: #{tpu_custom_call.1} parent=23 // pred_check
          %p159 = pneg %p62
        $region30: #{tpu_custom_call.1} parent=23 // pred_check_branch
          %161 = sbr.rel (%p159) target = $region32
        $region31: #{tpu_custom_call.1} parent=23 // pred_region
          %s163 = ssub.s32 128, 128
          %164 = vsyncadd %s155, %s163
          %s165 = smul.addr %s18, 128
          %s166 = scalar_lea.hbm %s1, %s165
          %s168 = sshll.u32 %s158, 4
          %s169 = int_to_ptr.vmem [resolvable:$true] %s168
          %171 = dma.vmem_to_hbm [thread:$0]  %s169, 128, %s166, %s155
        $region32: #{tpu_custom_call.1} parent=23 // pred_fallthru
          _
      $region24: #{tpu_custom_call.1} parent=5 // pred_fallthru
        _
      %p172 = scmp.le.s32.totalorder 2, %s13
      // Predicated region
      $region33: #{tpu_custom_call.1} parent=5 // pred_check
        %p173 = pneg %p172
      $region34: #{tpu_custom_call.1} parent=5 // pred_check_branch
        %175 = sbr.rel (%p173) target = $region36
      $region35: #{tpu_custom_call.1} parent=5 // pred_region
        %s176 = ssub.s32 %s13, 2
        // Predicated region
        $region37: #{tpu_custom_call.1} parent=35 // pred_check
          %p177 = pneg %p68
        $region38: #{tpu_custom_call.1} parent=35 // pred_check_branch
          %179 = sbr.rel (%p177) target = $region40
        $region39: #{tpu_custom_call.1} parent=35 // pred_region
          %s180 = sand.u32 %s53, 1
          %s181 = scalar_lea.sflag [#allocation4], %s180
          %s182 = sand.u32 %s53, 1
          %s183 = smul.addr %s182, 8
          %s184 = scalar_lea.vmem [#allocation5], %s183
          %185 = dma.done %s181, 128
        $region40: #{tpu_custom_call.1} parent=35 // pred_fallthru
          _
      $region36: #{tpu_custom_call.1} parent=5 // pred_fallthru
        _
    $region6: #{tpu_custom_call.1} parent=1 // loop_footer
      %s17 = sadd.s32 1, %s13
    $region7: #{tpu_custom_call.1} parent=1 // loop_footer_branch
      %12 = sbr.rel target = $region3
    $region8: #{tpu_custom_call.1} parent=1 // loop_exit
      _
    %186 = vsyncpa [#allocation3], 1
    %s187 = scalar_lea.sflag [#allocation3], 1
    %188 = vsyncpa %s187, 1
    %189 = vsyncpa [#allocation4], 1
    %s190 = scalar_lea.sflag [#allocation4], 1
    %191 = vsyncpa %s190, 1

</llo_original>
